<compile_context>
chip_gen: v7x
topology: tpu7x:2x2x1
jax: 0.10.0
libtpu: 0.0.40
codegen_flags: <defaults>
</compile_context>

<pallas_src>
import jax
import jax.numpy as jnp
from jax.experimental import pallas as pl
from jax.experimental.pallas import tpu as pltpu

LANE = 128  # TPU lane width


def mlp_kernel(x_ref, w1_ref, b1_ref, w2_ref, b2_ref, o_ref):
    # Cast the loaded x tile to the dot dtype in-kernel (cheap VPU op, hidden
    # under MXU/DMA slack) instead of a wrapper-side astype (extra HBM pass).
    x = x_ref[...].astype(w1_ref.dtype)
    # Hidden layer: (B, K) @ (K, 128) on the MXU, f32 accumulation.
    h = jnp.dot(x, w1_ref[...], preferred_element_type=jnp.float32)
    h = h + b1_ref[...]                      # (1, 128) row broadcasts over batch
    # Dropout(0.9): identity in eval mode.
    # TODO(synk): training-mode dropout (Bernoulli mask + 1/(1-p) scale) would
    # need pltpu.prng_seed / prng_random_bits; forward here matches eval mode.
    h = jnp.maximum(h, 0.0)                  # ReLU in f32 (VPU)
    # Output layer: (B, 128) @ (128, 128), f32 accumulation.  Cast h to the
    # weight dtype so a bf16 weight path keeps the second matmul on bf16 MXU.
    z = jnp.dot(h.astype(w2_ref.dtype), w2_ref[...],
                preferred_element_type=jnp.float32)
    z = z + b2_ref[...]
    # Lane-dense (tb, 128) store; padded lanes (= sigmoid(0) = 0.5) are sliced
    # off by the wrapper.
    o_ref[...] = jax.nn.sigmoid(z).astype(o_ref.dtype)


def prepare_params(w1_t, b1, w2_t, b2, dot_dtype=jnp.bfloat16, lane=LANE):
    """One-time parameter prep (call at init, NOT per forward):
      * zero-pad hidden (100 -> 128) and n_output (8 -> 128) to lane multiples,
      * biases reshaped to f32 rows,
      * W1/W2 cast to dot_dtype (bf16 by default — bf16-native MXU on all gens).
    Exact for the real output lanes: padded W1 cols / b1 entries are 0 ->
    ReLU(0)=0 -> padded W2 rows are 0 -> zero contribution.  Padded output
    columns evaluate to sigmoid(0)=0.5 and are sliced off by the wrappers."""
    n_feature, hidden = w1_t.shape
    n_output = w2_t.shape[1]
    hp = pl.cdiv(hidden, lane) * lane
    op = pl.cdiv(n_output, lane) * lane
    w1_p = jnp.pad(w1_t, ((0, 0), (0, hp - hidden)))
    b1_p = jnp.pad(b1, (0, hp - hidden))
    w2_p = jnp.pad(w2_t, ((0, hp - hidden), (0, op - n_output)))
    b2_p = jnp.pad(b2, (0, op - n_output))
    if dot_dtype is not None:
        w1_p = w1_p.astype(dot_dtype)
        w2_p = w2_p.astype(dot_dtype)
    return {
        "w1": w1_p,                                        # (n_feature, 128)
        "b1": b1_p.reshape(1, hp).astype(jnp.float32),     # (1, 128)
        "w2": w2_p,                                        # (128, 128)
        "b2": b2_p.reshape(1, op).astype(jnp.float32),     # (1, 128)
        "n_output": n_output,
    }


def _cost_estimate(B, n_feature, hp, op, w_bytes):
    return pl.CostEstimate(
        flops=2 * B * (n_feature * hp + hp * op),
        transcendentals=B * op,                 # sigmoid
        bytes_accessed=B * n_feature * 4 + B * op * 4
        + (n_feature * hp + hp * op) * w_bytes + (hp + op) * 4,
    )


def net_forward(x, params):
    """Gridless path: every operand VMEM-resident, no pipeline / per-step
    overhead.  Preferred on v5e/v6e (single TC) whenever x fits VMEM."""
    B, n_feature = x.shape
    w1, b1, w2, b2 = params["w1"], params["b1"], params["w2"], params["b2"]
    hp, op = w2.shape
    vmem = pl.BlockSpec(memory_space=pltpu.MemorySpace.VMEM)
    out = pl.pallas_call(
        mlp_kernel,
        out_shape=jax.ShapeDtypeStruct((B, op), jnp.float32),
        in_specs=[vmem] * 5,
        out_specs=vmem,
        cost_estimate=_cost_estimate(B, n_feature, hp, op, w1.dtype.itemsize),
    )(x, w1, b1, w2, b2)
    return out[:, :params["n_output"]]


def net_forward_tiled(x, params, tb=None):
    """Tiled path: batch grid axis marked "parallel" so v7x's two TensorCores
    split it; weights/biases stay resident (constant index_map).  Default tb
    gives exactly 2 grid steps — one per v7x core; extra steps for a model this
    small only add ~0.35 us/step overhead.  VMEM use per step (double-buffered
    (tb,32) f32 x tile + (tb,128) f32 out tile + resident weights) stays far
    under the 32 MiB scoped default for any reasonable tb, incl. v7x's 64 MiB
    physical VMEM."""
    B, n_feature = x.shape
    w1, b1, w2, b2 = params["w1"], params["b1"], params["w2"], params["b2"]
    hp, op = w2.shape
    if tb is None:
        tb = max(8, ((pl.cdiv(B, 2) + 7) // 8) * 8)   # 2-step parallel grid
    tb = min(tb, B)
    out = pl.pallas_call(
        mlp_kernel,
        out_shape=jax.ShapeDtypeStruct((B, op), jnp.float32),
        grid=(pl.cdiv(B, tb),),
        in_specs=[
            pl.BlockSpec((tb, n_feature), lambda i: (i, 0)),
            pl.BlockSpec((n_feature, hp), lambda i: (0, 0)),
            pl.BlockSpec((1, hp), lambda i: (0, 0)),
            pl.BlockSpec((hp, op), lambda i: (0, 0)),
            pl.BlockSpec((1, op), lambda i: (0, 0)),
        ],
        out_specs=pl.BlockSpec((tb, op), lambda i: (i, 0)),
        compiler_params=pltpu.CompilerParams(
            dimension_semantics=("parallel",)),
        cost_estimate=_cost_estimate(B, n_feature, hp, op, w1.dtype.itemsize),
    )(x, w1, b1, w2, b2)
    return out[:, :params["n_output"]]


def init_params(key, n_feature, n_output, hidden=100):
    """Deterministic init mimicking torch.nn.Linear (uniform +/-1/sqrt(fan_in)).
    Weights stored pre-transposed as (in_features, out_features)."""
    k1, k2, k3, k4 = jax.random.split(key, 4)
    bound1 = 1.0 / jnp.sqrt(jnp.float32(n_feature))
    bound2 = 1.0 / jnp.sqrt(jnp.float32(hidden))
    w1_t = jax.random.uniform(k1, (n_feature, hidden), jnp.float32, -bound1, bound1)
    b1 = jax.random.uniform(k2, (hidden,), jnp.float32, -bound1, bound1)
    w2_t = jax.random.uniform(k3, (hidden, n_output), jnp.float32, -bound2, bound2)
    b2 = jax.random.uniform(k4, (n_output,), jnp.float32, -bound2, bound2)
    return w1_t, b1, w2_t, b2


if __name__ == "__main__":
    key = jax.random.PRNGKey(0)
    k_x, k_xl, k_p = jax.random.split(key, 3)

    batch, n_feature, n_output, hidden = 8, 32, 8, 100
    w1_t, b1, w2_t, b2 = init_params(k_p, n_feature, n_output, hidden)
    x = jax.random.normal(k_x, (batch, n_feature), jnp.float32)

    # Pure-JAX reference on the unpadded params (eval-mode dropout = identity).
    def ref_fn(xv):
        return jax.nn.sigmoid(jnp.maximum(xv @ w1_t + b1, 0.0) @ w2_t + b2)

    # --- Exact f32 params, gridless VMEM-resident path (small batch) ---
    params_f32 = prepare_params(w1_t, b1, w2_t, b2, dot_dtype=None)
    out = jax.block_until_ready(net_forward(x, params_f32))
    assert out.shape == (batch, n_output)
    assert jnp.allclose(out, ref_fn(x), atol=1e-5), "f32 mismatch vs reference"

    # --- Default bf16 dot operands, tiled 2-step parallel grid, larger batch ---
    params_bf16 = prepare_params(w1_t, b1, w2_t, b2)   # dot_dtype=bf16 default
    big_batch = 512
    x_big = jax.random.normal(k_xl, (big_batch, n_feature), jnp.float32)
    out_big = jax.block_until_ready(net_forward_tiled(x_big, params_bf16))
    assert out_big.shape == (big_batch, n_output)
    assert jnp.allclose(out_big, ref_fn(x_big), atol=3e-2), "bf16 mismatch vs reference"

    print("KERNEL_OK")
</pallas_src>

<mosaic_0001>
module attributes {stable_mosaic.version = 11 : i64} {
  func.func @mlp_kernel(%arg0: memref<8x32xf32, #tpu.memory_space<vmem>>, %arg1: memref<32x128xf32, #tpu.memory_space<vmem>>, %arg2: memref<1x128xf32, #tpu.memory_space<vmem>>, %arg3: memref<128x128xf32, #tpu.memory_space<vmem>>, %arg4: memref<1x128xf32, #tpu.memory_space<vmem>>, %arg5: memref<8x128xf32, #tpu.memory_space<vmem>>) attributes {dimension_semantics = [], scalar_prefetch = 0 : i64, scratch_operands = 0 : i64, tpu.core_type = #tpu.core_type<tc>} {
    %c0 = arith.constant 0 : index
    %c0_0 = arith.constant 0 : index
    %0 = vector.load %arg0[%c0, %c0_0] : memref<8x32xf32, #tpu.memory_space<vmem>>, vector<8x32xf32>
    %c0_1 = arith.constant 0 : index
    %c0_2 = arith.constant 0 : index
    %1 = vector.load %arg1[%c0_1, %c0_2] : memref<32x128xf32, #tpu.memory_space<vmem>>, vector<32x128xf32>
    %cst = arith.constant dense<0.000000e+00> : vector<8x128xf32>
    %2 = tpu.matmul %0, %1, %cst {dimension_numbers = #tpu.dot_dimension_numbers<[1], [0], [0], [1], [0, 0, 1, 1], [], []>} : vector<8x32xf32>, vector<32x128xf32>, vector<8x128xf32> -> vector<8x128xf32>
    %c0_3 = arith.constant 0 : index
    %c0_4 = arith.constant 0 : index
    %3 = vector.load %arg2[%c0_3, %c0_4] : memref<1x128xf32, #tpu.memory_space<vmem>>, vector<1x128xf32>
    %4 = vector.broadcast %3 : vector<1x128xf32> to vector<8x128xf32>
    %5 = arith.addf %2, %4 : vector<8x128xf32>
    %cst_5 = arith.constant 0.000000e+00 : f32
    %6 = vector.broadcast %cst_5 : f32 to vector<8x128xf32>
    %7 = arith.maximumf %5, %6 : vector<8x128xf32>
    %c0_6 = arith.constant 0 : index
    %c0_7 = arith.constant 0 : index
    %8 = vector.load %arg3[%c0_6, %c0_7] : memref<128x128xf32, #tpu.memory_space<vmem>>, vector<128x128xf32>
    %cst_8 = arith.constant dense<0.000000e+00> : vector<8x128xf32>
    %9 = tpu.matmul %7, %8, %cst_8 {dimension_numbers = #tpu.dot_dimension_numbers<[1], [0], [0], [1], [0, 0, 1, 1], [], []>} : vector<8x128xf32>, vector<128x128xf32>, vector<8x128xf32> -> vector<8x128xf32>
    %c0_9 = arith.constant 0 : index
    %c0_10 = arith.constant 0 : index
    %10 = vector.load %arg4[%c0_9, %c0_10] : memref<1x128xf32, #tpu.memory_space<vmem>>, vector<1x128xf32>
    %11 = vector.broadcast %10 : vector<1x128xf32> to vector<8x128xf32>
    %12 = arith.addf %9, %11 : vector<8x128xf32>
    %13 = arith.negf %12 : vector<8x128xf32>
    %14 = math.exp %13 : vector<8x128xf32>
    %cst_11 = arith.constant 1.000000e+00 : f32
    %15 = vector.broadcast %cst_11 : f32 to vector<8x128xf32>
    %16 = arith.addf %15, %14 : vector<8x128xf32>
    %17 = arith.divf %15, %16 : vector<8x128xf32>
    %c0_12 = arith.constant 0 : index
    %c0_13 = arith.constant 0 : index
    %18 = vector.load %arg5[%c0_12, %c0_13] : memref<8x128xf32, #tpu.memory_space<vmem>>, vector<8x128xf32>
    tpu.vector_store %arg5[%c0_12, %c0_13], %17 {strides = array<i32>} : memref<8x128xf32, #tpu.memory_space<vmem>>, vector<8x128xf32>,
    return
  }
}

</mosaic_0001>

<llo_original>
// kernel: tpu_custom_call.1
$region0: #{tpu_custom_call.1}
  #allocation0 [shape = 'u32[]', space=smem, size = 0x4, offset = 0x4, fixed_abs, tag = 'smem constant byte address 0x4 - core index']
  #allocation1 [shape = 'u32[144,128]{1,0:T(1,128)}', space=vmem, size = 0x12000, scoped, tag = 'internal scratch']
  %s0 = inlined_call_operand.hbm [shape: f32[8,32], index: 0, kind: input, shape index: {}]
  %s1 = inlined_call_operand.hbm [shape: f32[32,128], index: 1, kind: input, shape index: {}]
  %s2 = inlined_call_operand.vmem [shape: f32[1,128], index: 2, kind: input, shape index: {}]
  %s3 = inlined_call_operand.hbm [shape: f32[128,128], index: 3, kind: input, shape index: {}]
  %s4 = inlined_call_operand.vmem [shape: f32[1,128], index: 4, kind: input, shape index: {}]
  %s5 = inlined_call_operand.hbm [shape: f32[8,128], index: 5, kind: output, shape index: {}]
  %s6 = sld [smem:[#allocation0]]
  $region42: #{tpu_custom_call.1} parent=0
    _
  %s8 = ssub.s32 1, %s6
  %s9 = scalar_select 0, %s8, %s6
  $region1: #{tpu_custom_call.1} parent=0
    #allocation2 [shape = 'u8[4096]{0}', space=vmem, size = 0x1000, scoped, tag = 'input window, operand 0, single buffered']
    #allocation3 [shape = 's32[1]{0}', space=sflag, size = 0x4, scoped, tag = 'scoped memory for tpu_custom_call.1']
    #allocation4 [shape = 's32[1]{0}', space=sflag, size = 0x4, scoped, tag = 'scoped memory for tpu_custom_call.1']
    #allocation5 [shape = 'u8[16384]{0}', space=vmem, size = 0x4000, scoped, tag = 'input window, operand 1, single buffered']
    #allocation6 [shape = 's32[1]{0}', space=sflag, size = 0x4, scoped, tag = 'scoped memory for tpu_custom_call.1']
    #allocation7 [shape = 'u8[65536]{0}', space=vmem, size = 0x10000, scoped, tag = 'input window, operand 3, single buffered']
    #allocation8 [shape = 'u8[4096]{0}', space=vmem, size = 0x1000, scoped, tag = 'output window, operand 0, single buffered']
    %10 = vsyncpa [#allocation3], 0
    %11 = vsyncpa [#allocation6], 0
    %12 = vsyncpa [#allocation4], 0
    // Predicated region
    $region2: #{tpu_custom_call.1} parent=1 // pred_check
      _
    $region3: #{tpu_custom_call.1} parent=1 // pred_check_branch
      %14 = sbr.rel (0) target = $region5
    $region4: #{tpu_custom_call.1} parent=1 // pred_region
      %s16 = ssub.s32 128, 128
      %17 = vsyncadd [#allocation3], %s16
      %s19 = sshll.u32 [#allocation2], 4
      %s20 = int_to_ptr.vmem [resolvable:$true] %s19
      %22 = dma.hbm_to_vmem [thread:$0]  %s0, 128, %s20, [#allocation3]
    $region5: #{tpu_custom_call.1} parent=1 // pred_fallthru
      _
    // Predicated region
    $region6: #{tpu_custom_call.1} parent=1 // pred_check
      _
    $region7: #{tpu_custom_call.1} parent=1 // pred_check_branch
      %24 = sbr.rel (0) target = $region9
    $region8: #{tpu_custom_call.1} parent=1 // pred_region
      %s26 = ssub.s32 512, 512
      %27 = vsyncadd [#allocation6], %s26
      %s28 = sshll.u32 [#allocation5], 4
      %s29 = int_to_ptr.vmem [resolvable:$true] %s28
      %34 = dma.hbm_to_vmem [thread:$0]  %s1, 512, %s29, [#allocation6], 128, 128, 8
    $region9: #{tpu_custom_call.1} parent=1 // pred_fallthru
      _
    // Predicated region
    $region10: #{tpu_custom_call.1} parent=1 // pred_check
      _
    $region11: #{tpu_custom_call.1} parent=1 // pred_check_branch
      %36 = sbr.rel (0) target = $region13
    $region12: #{tpu_custom_call.1} parent=1 // pred_region
      _
    $region13: #{tpu_custom_call.1} parent=1 // pred_fallthru
      _
    // Predicated region
    $region14: #{tpu_custom_call.1} parent=1 // pred_check
      _
    $region15: #{tpu_custom_call.1} parent=1 // pred_check_branch
      %38 = sbr.rel (0) target = $region17
    $region16: #{tpu_custom_call.1} parent=1 // pred_region
      %s40 = ssub.s32 2048, 2048
      %41 = vsyncadd [#allocation6], %s40
      %s42 = sshll.u32 [#allocation7], 4
      %s43 = int_to_ptr.vmem [resolvable:$true] %s42
      %48 = dma.hbm_to_vmem [thread:$0]  %s3, 2048, %s43, [#allocation6], 128, 128, 8
    $region17: #{tpu_custom_call.1} parent=1 // pred_fallthru
      _
    // Predicated region
    $region18: #{tpu_custom_call.1} parent=1 // pred_check
      _
    $region19: #{tpu_custom_call.1} parent=1 // pred_check_branch
      %50 = sbr.rel (0) target = $region21
    $region20: #{tpu_custom_call.1} parent=1 // pred_region
      _
    $region21: #{tpu_custom_call.1} parent=1 // pred_fallthru
      _
    // Predicated region
    $region22: #{tpu_custom_call.1} parent=1 // pred_check
      _
    $region23: #{tpu_custom_call.1} parent=1 // pred_check_branch
      %52 = sbr.rel (0) target = $region25
    $region24: #{tpu_custom_call.1} parent=1 // pred_region
      %53 = dma.done [#allocation3], 128
    $region25: #{tpu_custom_call.1} parent=1 // pred_fallthru
      _
    // Predicated region
    $region26: #{tpu_custom_call.1} parent=1 // pred_check
      _
    $region27: #{tpu_custom_call.1} parent=1 // pred_check_branch
      %55 = sbr.rel (0) target = $region29
    $region28: #{tpu_custom_call.1} parent=1 // pred_region
      %56 = dma.done [#allocation6], 512
    $region29: #{tpu_custom_call.1} parent=1 // pred_fallthru
      _
    // Predicated region
    $region30: #{tpu_custom_call.1} parent=1 // pred_check
      _
    $region31: #{tpu_custom_call.1} parent=1 // pred_check_branch
      %58 = sbr.rel (0) target = $region33
    $region32: #{tpu_custom_call.1} parent=1 // pred_region
      %59 = dma.done [#allocation6], 2048
    $region33: #{tpu_custom_call.1} parent=1 // pred_fallthru
      _
    %v60 = vld [vmem:[#allocation2] sm:$0xff]
    %v61 = vld [vmem:[#allocation5] sm:$0xff]
    %v62 = vld [vmem:[#allocation5 + $0x8] sm:$0xff]
    %v63 = vld [vmem:[#allocation5 + $0x10] sm:$0xff]
    %v64 = vld [vmem:[#allocation5 + $0x18] sm:$0xff]
    %v65 = vld [vmem:[%s2] sm:$0x1]
    %v67 = vlaneseq
    %v68 = vshrl.u32 %v67, 7
    %v69 = vsub.s32 0, %v68
    %v70 = vrot.slane %v65, %v69
    %vm72 = vcmask 261120
    %v74 = vsel %vm72, %v60, 0
    %76 = vmatprep.subr.mxu0 0.0
    %77 = vmatpush1.msra.mxu0 %v61
    %78 = vmatprep.subr.mxu0 0.0
    %79 = vmatpush1.msra.mxu0 %v62
    %80 = vmatprep.subr.mxu0 0.0
    %81 = vmatpush1.msra.mxu0 %v63
    %82 = vmatprep.subr.mxu0 0.0
    %83 = vmatpush1.msra.mxu0 %v64
    %84 = vmatprep.subr.mxu0 0.0
    %85 = vmatpush1.msra.mxu0 0.0
    %86 = vmatprep.subr.mxu0 0.0
    %87 = vmatpush1.msra.mxu0 0.0
    %88 = vmatprep.subr.mxu0 0.0
    %89 = vmatpush1.msra.mxu0 0.0
    %90 = vmatprep.subr.mxu0 0.0
    %91 = vmatpush1.msra.mxu0 0.0
    %92 = vmatprep.subr.mxu0 0.0
    %93 = vmatpush1.msra.mxu0 0.0
    %94 = vmatprep.subr.mxu0 0.0
    %95 = vmatpush1.msra.mxu0 0.0
    %96 = vmatprep.subr.mxu0 0.0
    %97 = vmatpush1.msra.mxu0 0.0
    %98 = vmatprep.subr.mxu0 0.0
    %99 = vmatpush1.msra.mxu0 0.0
    %100 = vmatprep.subr.mxu0 0.0
    %101 = vmatpush1.msra.mxu0 0.0
    %102 = vmatprep.subr.mxu0 0.0
    %103 = vmatpush1.msra.mxu0 0.0
    %104 = vmatprep.subr.mxu0 0.0
    %105 = vmatpush1.msra.mxu0 0.0
    %106 = vmatprep.subr.mxu0 0.0
    %107 = vmatpush1.msra.mxu0 0.0
    %108 = vmatprep.subr.mxu0 0.0
    %109 = vmatpush1.msra.mxu0 0.0
    %110 = vmatprep.subr.mxu0 0.0
    %111 = vmatpush1.msra.mxu0 0.0
    %112 = vmatprep.subr.mxu0 0.0
    %113 = vmatpush1.msra.mxu0 0.0
    %114 = vmatprep.subr.mxu0 0.0
    %115 = vmatpush1.msra.mxu0 0.0
    %116 = vmatprep.subr.mxu0 0.0
    %117 = vmatpush1.msra.mxu0 0.0
    %118 = vmatprep.subr.mxu0 0.0
    %119 = vmatpush1.msra.mxu0 0.0
    %120 = vmatprep.subr.mxu0 0.0
    %121 = vmatpush1.msra.mxu0 0.0
    %122 = vmatprep.subr.mxu0 0.0
    %123 = vmatpush1.msra.mxu0 0.0
    %124 = vmatprep.subr.mxu0 0.0
    %125 = vmatpush1.msra.mxu0 0.0
    %126 = vmatprep.subr.mxu0 0.0
    %127 = vmatpush1.msra.mxu0 0.0
    %128 = vmatprep.subr.mxu0 0.0
    %129 = vmatpush1.msra.mxu0 0.0
    %130 = vmatprep.subr.mxu0 0.0
    %131 = vmatpush1.msra.mxu0 0.0
    %132 = vmatprep.subr.mxu0 0.0
    %133 = vmatpush1.msra.mxu0 0.0
    %134 = vmatprep.subr.mxu0 0.0
    %135 = vmatpush1.msra.mxu0 0.0
    %136 = vmatprep.subr.mxu0 0.0
    %137 = vmatpush1.msra.mxu0 0.0
    %138 = vmatprep.subr.mxu0 0.0
    %139 = vmatpush1.msra.mxu0 0.0
    %140 = vmatprep.mubr.f32.mxu0 0.0
    %141 = vmatmul.mubr.f32.gmra.mrb[0].mxu0 %v74
    %v142 = vpop.f32.mrb[0].mxu0
    %v143 = vadd.f32 %v70, %v142
    %v144 = vpop.f32.mrb[0].mxu0
    %145 = vdwg.mxu0
    %v146 = vmax.f32 %v143, 0.0
    %v147 = vld [vmem:[#allocation7] sm:$0xff]
    %v148 = vld [vmem:[#allocation7 + $0x8] sm:$0xff]
    %v149 = vld [vmem:[#allocation7 + $0x10] sm:$0xff]
    %v150 = vld [vmem:[#allocation7 + $0x18] sm:$0xff]
    %v151 = vld [vmem:[#allocation7 + $0x20] sm:$0xff]
    %v152 = vld [vmem:[#allocation7 + $0x28] sm:$0xff]
    %v153 = vld [vmem:[#allocation7 + $0x30] sm:$0xff]
    %v154 = vld [vmem:[#allocation7 + $0x38] sm:$0xff]
    %v155 = vld [vmem:[#allocation7 + $0x40] sm:$0xff]
    %v156 = vld [vmem:[#allocation7 + $0x48] sm:$0xff]
    %v157 = vld [vmem:[#allocation7 + $0x50] sm:$0xff]
    %v158 = vld [vmem:[#allocation7 + $0x58] sm:$0xff]
    %v159 = vld [vmem:[#allocation7 + $0x60] sm:$0xff]
    %v160 = vld [vmem:[#allocation7 + $0x68] sm:$0xff]
    %v161 = vld [vmem:[#allocation7 + $0x70] sm:$0xff]
    %v162 = vld [vmem:[#allocation7 + $0x78] sm:$0xff]
    %v163 = vld [vmem:[%s4] sm:$0x1]
    %v165 = vlaneseq
    %v166 = vshrl.u32 %v165, 7
    %v167 = vsub.s32 0, %v166
    %v168 = vrot.slane %v163, %v167
    %170 = vmatprep.subr.mxu0 0.0
    %171 = vmatpush1.msra.mxu0 %v147
    %172 = vmatprep.subr.mxu0 0.0
    %173 = vmatpush1.msra.mxu0 %v148
    %174 = vmatprep.subr.mxu0 0.0
    %175 = vmatpush1.msra.mxu0 %v149
    %176 = vmatprep.subr.mxu0 0.0
    %177 = vmatpush1.msra.mxu0 %v150
    %178 = vmatprep.subr.mxu0 0.0
    %179 = vmatpush1.msra.mxu0 %v151
    %180 = vmatprep.subr.mxu0 0.0
    %181 = vmatpush1.msra.mxu0 %v152
    %182 = vmatprep.subr.mxu0 0.0
    %183 = vmatpush1.msra.mxu0 %v153
    %184 = vmatprep.subr.mxu0 0.0
    %185 = vmatpush1.msra.mxu0 %v154
    %186 = vmatprep.subr.mxu0 0.0
    %187 = vmatpush1.msra.mxu0 %v155
    %188 = vmatprep.subr.mxu0 0.0
    %189 = vmatpush1.msra.mxu0 %v156
    %190 = vmatprep.subr.mxu0 0.0
    %191 = vmatpush1.msra.mxu0 %v157
    %192 = vmatprep.subr.mxu0 0.0
    %193 = vmatpush1.msra.mxu0 %v158
    %194 = vmatprep.subr.mxu0 0.0
    %195 = vmatpush1.msra.mxu0 %v159
    %196 = vmatprep.subr.mxu0 0.0
    %197 = vmatpush1.msra.mxu0 %v160
    %198 = vmatprep.subr.mxu0 0.0
    %199 = vmatpush1.msra.mxu0 %v161
    %200 = vmatprep.subr.mxu0 0.0
    %201 = vmatpush1.msra.mxu0 %v162
    %202 = vmatprep.subr.mxu0 0.0
    %203 = vmatpush1.msra.mxu0 0.0
    %204 = vmatprep.subr.mxu0 0.0
    %205 = vmatpush1.msra.mxu0 0.0
    %206 = vmatprep.subr.mxu0 0.0
    %207 = vmatpush1.msra.mxu0 0.0
    %208 = vmatprep.subr.mxu0 0.0
    %209 = vmatpush1.msra.mxu0 0.0
    %210 = vmatprep.subr.mxu0 0.0
    %211 = vmatpush1.msra.mxu0 0.0
    %212 = vmatprep.subr.mxu0 0.0
    %213 = vmatpush1.msra.mxu0 0.0
    %214 = vmatprep.subr.mxu0 0.0
    %215 = vmatpush1.msra.mxu0 0.0
    %216 = vmatprep.subr.mxu0 0.0
    %217 = vmatpush1.msra.mxu0 0.0
    %218 = vmatprep.subr.mxu0 0.0
    %219 = vmatpush1.msra.mxu0 0.0
    %220 = vmatprep.subr.mxu0 0.0
    %221 = vmatpush1.msra.mxu0 0.0
    %222 = vmatprep.subr.mxu0 0.0
    %223 = vmatpush1.msra.mxu0 0.0
    %224 = vmatprep.subr.mxu0 0.0
    %225 = vmatpush1.msra.mxu0 0.0
    %226 = vmatprep.subr.mxu0 0.0
    %227 = vmatpush1.msra.mxu0 0.0
    %228 = vmatprep.subr.mxu0 0.0
    %229 = vmatpush1.msra.mxu0 0.0
    %230 = vmatprep.subr.mxu0 0.0
    %231 = vmatpush1.msra.mxu0 0.0
    %232 = vmatprep.subr.mxu0 0.0
    %233 = vmatpush1.msra.mxu0 0.0
    %234 = vmatprep.mubr.f32.mxu0 0.0
    %235 = vmatmul.mubr.f32.gmra.mrb[0].mxu0 %v146
    %v236 = vpop.f32.mrb[0].mxu0
    %v237 = vadd.f32 %v168, %v236
    %v238 = vpop.f32.mrb[0].mxu0
    %239 = vdwg.mxu0
    %v240 = vxor.u32 %v237, 2147483648
    %v241 = vmul.f32 %v240, 1.442695
    %v242 = vpow.pop %v241
    %v243 = vadd.f32 %v242, 1.0
    %v244 = vrcp.pop %v243
    %v245 = vmul.f32 1.0, %v244
    %246 = vst [vmem:[#allocation8] sm:$0xff] %v245
    // Predicated region
    $region34: #{tpu_custom_call.1} parent=1 // pred_check
      _
    $region35: #{tpu_custom_call.1} parent=1 // pred_check_branch
      %248 = sbr.rel (0) target = $region37
    $region36: #{tpu_custom_call.1} parent=1 // pred_region
      %s250 = ssub.s32 128, 128
      %251 = vsyncadd [#allocation4], %s250
      %s253 = sshll.u32 [#allocation8], 4
      %s254 = int_to_ptr.vmem [resolvable:$true] %s253
      %256 = dma.vmem_to_hbm [thread:$0]  %s254, 128, %s5, [#allocation4]
    $region37: #{tpu_custom_call.1} parent=1 // pred_fallthru
      _
    // Predicated region
    $region38: #{tpu_custom_call.1} parent=1 // pred_check
      _
    $region39: #{tpu_custom_call.1} parent=1 // pred_check_branch
      %258 = sbr.rel (0) target = $region41
    $region40: #{tpu_custom_call.1} parent=1 // pred_region
      %259 = dma.done [#allocation4], 128
    $region41: #{tpu_custom_call.1} parent=1 // pred_fallthru
      _
    %260 = vsyncpa [#allocation3], 1
    %261 = vsyncpa [#allocation6], 1
    %262 = vsyncpa [#allocation4], 1

</llo_original>
